<compile_context>
chip_gen: v7x
topology: tpu7x:2x2x1
jax: 0.10.0
libtpu: 0.0.40
codegen_flags: <defaults>
</compile_context>

<pallas_src>
import numpy as np
import jax
import jax.numpy as jnp
from jax.experimental import pallas as pl
from jax.experimental.pallas import tpu as pltpu


# ---------------------------------------------------------------------------
# Deterministic setup: build the 5 band operators exactly following the
# pywt.cwt('morl', precision=10) semantics used by the module.
# ---------------------------------------------------------------------------
def _central_frequency_morl(precision=8):
    # replicates pywt.central_frequency('morl')  (== 0.8125)
    x = np.linspace(-8.0, 8.0, 2 ** precision)
    psi = np.exp(-x ** 2 / 2.0) * np.cos(5.0 * x)
    domain = float(x[-1] - x[0])
    index = int(np.argmax(np.abs(np.fft.fft(psi)[1:]))) + 2
    if index > len(psi) / 2:
        index = len(psi) - index + 2
    return 1.0 / (domain / (index - 1))


def _morlet_int_psi(precision=10):
    # replicates pywt.integrate_wavelet('morl', precision=10)
    x = np.linspace(-8.0, 8.0, 2 ** precision)
    psi = np.exp(-x ** 2 / 2.0) * np.cos(5.0 * x)
    int_psi = np.cumsum(psi) * (x[1] - x[0])
    return int_psi, x


def _cwt_matrix(scale, int_psi, x, n):
    """Dense (n x n) operator M s.t. pywt.cwt(sig, [scale], 'morl')[0][0] == M @ sig."""
    step = x[1] - x[0]
    j = np.arange(scale * (x[-1] - x[0]) + 1) / (scale * step)
    j = j.astype(int)
    if j[-1] >= int_psi.size:
        j = np.extract(j < int_psi.size, j)
    f = int_psi[j][::-1].astype(np.float64)          # scale-resampled, reversed filter
    L = f.shape[0]
    # full convolution -> np.diff -> center trim to length n, as a matrix
    fpad = np.concatenate([np.zeros(n), f, np.zeros(n)])
    D = np.diff(fpad)                                 # D[m] = fpad[m+1] - fpad[m]
    fd = int(np.floor((L - 2) / 2.0))                 # = floor((conv_diff_len - n)/2)
    t = np.arange(n)[:, None]
    k = np.arange(n)[None, :]
    return -np.sqrt(scale) * D[n + fd + t - k]


def build_band_operators(n_samples, sfreq=500):
    """Returns W of shape (5, T, T), W[b] = A_b^T so that out_row = x_row @ W[b]."""
    freqs = np.linspace(1, 100, 150)
    scales = _central_frequency_morl() * sfreq / freqs
    int_psi, x = _morlet_int_psi(precision=10)
    mats = np.stack([_cwt_matrix(s, int_psi, x, n_samples) for s in scales])  # (150,T,T)

    band_edges = np.arange(0, 101, 4)
    sub = []
    for i in range(len(band_edges) - 1):
        fmin, fmax = band_edges[i], band_edges[i + 1]
        idx = np.where((freqs >= fmin) & (freqs < fmax))[0]
        if len(idx) > 0:
            sub.append(mats[idx].mean(axis=0))
        else:
            sub.append(np.zeros((n_samples, n_samples)))
    sub = np.stack(sub)                                # (25, T, T)
    bands = np.stack([sub[0],                          # delta
                      sub[1],                          # theta
                      sub[2],                          # alpha
                      sub[3:8].mean(axis=0),           # beta
                      sub[8:].mean(axis=0)])           # gamma
    return np.transpose(bands, (0, 2, 1)).astype(np.float32)


# ---------------------------------------------------------------------------
# Helpers
# ---------------------------------------------------------------------------
def _round_up(v, m):
    return -(-v // m) * m


def _largest_aligned_tile(dim, cap):
    """Largest multiple of 128 that divides `dim` (dim % 128 == 0) and is <= cap."""
    for t in range(min(cap, dim) // 128, 0, -1):
        if dim % (t * 128) == 0:
            return t * 128
    return 128


def prepare_band_operators(w_f32):
    """One-time setup (hoisted out of the forward path): pad the fixed (5, T, T)
    operators to lane/sublane multiples and cast to bf16 for the MXU."""
    _, T, _ = w_f32.shape
    Tp = _round_up(T, 128)
    if Tp != T:
        w_f32 = np.pad(w_f32, ((0, 0), (0, Tp - T), (0, Tp - T)))
    return jnp.asarray(w_f32, dtype=jnp.bfloat16)


# VMEM budget for the double-buffered blocks: stays well under v7x's 64 MiB
# physical VMEM (and trivially under v5e/v6e's 128 MiB).
_VMEM_TILE_BUDGET = 40 * 1024 * 1024


def _choose_tiles(N, Cp, Tp):
    """Pick (bn, tn): bn samples per M-tile (tm = bn*Cp rows), tn output lanes.
    Full-K blocks (tk == Tp), so only X, W and the output block occupy VMEM."""
    def footprint(bn, tn):
        tm = bn * Cp
        # double-buffered: bf16 X block + bf16 W block + f32 output block
        return 2 * (tm * Tp * 2 + Tp * tn * 2 + tm * tn * 4)

    # Lane-dense output tile; maximizing tn caps the X re-fetch factor (5*Tp/tn).
    tn = _largest_aligned_tile(Tp, 1024)
    # Target ~512 LHS rows per M-tile to feed the 256-wide MXU on v6e/v7x.
    bn = max(1, min(N, 512 // max(Cp, 1)))
    while tn > 128 and footprint(bn, tn) > _VMEM_TILE_BUDGET:
        tn = _largest_aligned_tile(Tp, tn - 128)
    while bn > 1 and footprint(bn, tn) > _VMEM_TILE_BUDGET:
        bn -= 1
    # Guard (review): very large Cp or Tp could blow a single full-K M-tile.
    assert footprint(bn, tn) <= _VMEM_TILE_BUDGET, (
        "signal length / channel count too large for a single full-K M-tile; "
        "split channels or time across multiple calls")
    return bn, tn


# ---------------------------------------------------------------------------
# Pallas kernel: full-K GEMM, output written directly in the final layout
# ---------------------------------------------------------------------------
def _band_gemm_kernel(x_ref, w_ref, o_ref):
    # x_ref : (tm, Tp)       bf16   rows = (sample, channel), lanes = time (full K)
    # w_ref : (Tp, tn)       bf16   band-b operator slice (band dim squeezed)
    # o_ref : (bn, Cp, tn)   f32    output block, already in (N, 5, C, T) layout
    acc = jnp.dot(x_ref[...], w_ref[...], preferred_element_type=jnp.float32)
    # Single reshaped store: splitting the sublane dim (bn*Cp -> bn, Cp) at a
    # multiple-of-8 boundary is a layout no-op -> one vectorized writeback.
    o_ref[...] = acc.reshape(o_ref.shape)


def wavelet_transform_5channel(x, w):
    """x: (N, C, T) float; w: (5, Tp, Tp) bf16 from prepare_band_operators.
    Returns (N, 5, C, T) float32, matching WaveletTransform5Channel.forward."""
    N, C, T = x.shape
    NB, Tp, _ = w.shape                                      # NB == 5 bands
    Cp = _round_up(C, 8)

    bn, tn = _choose_tiles(N, Cp, Tp)
    Np = _round_up(N, bn)
    tm = bn * Cp

    # LHS: rows = (sample, channel), lanes = time; bf16 feeds the MXU natively.
    xm = jnp.pad(x.astype(jnp.bfloat16),
                 ((0, Np - N), (0, Cp - C), (0, Tp - T))).reshape(Np * Cp, Tp)

    # Grid: band outermost, output-time next, M INNERMOST.  W's block index
    # depends only on (b, j), so across consecutive M steps Pallas keeps the
    # W buffer resident instead of re-DMAing it.
    grid = (NB, Tp // tn, Np // bn)

    Mp = Np * Cp
    cost = pl.CostEstimate(
        flops=2 * Mp * NB * Tp * Tp,
        transcendentals=0,
        bytes_accessed=Mp * Tp * 2 + NB * Tp * Tp * 2 + Np * NB * Cp * Tp * 4,
    )

    out = pl.pallas_call(
        _band_gemm_kernel,
        out_shape=jax.ShapeDtypeStruct((Np, NB, Cp, Tp), jnp.float32),
        grid=grid,
        in_specs=[
            # X tile: full contraction in one block; index ignores (b, j).
            pl.BlockSpec((tm, Tp), lambda b, j, i: (i, 0)),
            # W[b] slice: band dim squeezed; constant across the inner M axis.
            pl.BlockSpec((None, Tp, tn), lambda b, j, i: (b, 0, j)),
        ],
        out_specs=pl.BlockSpec((bn, None, Cp, tn),
                               lambda b, j, i: (i, b, 0, j)),
        compiler_params=pltpu.CompilerParams(
            dimension_semantics=("parallel", "parallel", "parallel"),
            vmem_limit_bytes=48 * 1024 * 1024,
        ),
        cost_estimate=cost,
    )(xm, w)

    # Only padding is trimmed; the kernel already wrote the (N, 5, C, T) layout.
    return out[:N, :, :C, :T]


if __name__ == "__main__":
    # Small shapes consistent with the module's (N, Chans, Samples) input.
    N, C, T = 2, 4, 128
    SFREQ = 500

    key = jax.random.PRNGKey(0)
    x = jax.random.normal(key, (N, C, T), dtype=jnp.float32)

    # Fixed, non-trainable band operators: built and prepped once at setup.
    w_f32 = build_band_operators(T, sfreq=SFREQ)             # (5, T, T), W[b] = A_b^T
    w_dev = prepare_band_operators(w_f32)                    # (5, Tp, Tp) bf16

    fwd = jax.jit(wavelet_transform_5channel)
    out = jax.block_until_ready(fwd(x, w_dev))

    assert out.shape == (N, 5, C, T), out.shape
    assert out.dtype == jnp.float32

    # Loose numerical smoke-check against the exact linear-operator reference
    # (bf16 inputs with f32 accumulation => small relative error).
    ref = np.einsum("nct,bts->nbcs",
                    np.asarray(x, np.float64), w_f32.astype(np.float64))
    err = float(np.max(np.abs(np.asarray(out, np.float64) - ref)))
    scale = float(np.max(np.abs(ref))) + 1e-12
    assert err / scale < 0.08, (err, scale)

    print("KERNEL_OK")
</pallas_src>

<mosaic_0001>
module attributes {stable_mosaic.version = 11 : i64} {
  func.func @_band_gemm_kernel(%arg0: i32, %arg1: i32, %arg2: i32, %arg3: memref<16x128xbf16, #tpu.memory_space<vmem>>, %arg4: memref<1x128x128xbf16, #tpu.memory_space<vmem>>, %arg5: memref<2x1x8x128xf32, #tpu.memory_space<vmem>>) attributes {dimension_semantics = [#tpu.dimension_semantics<parallel>, #tpu.dimension_semantics<parallel>, #tpu.dimension_semantics<parallel>], iteration_bounds = array<i64: 5, 1, 1>, scalar_prefetch = 0 : i64, scratch_operands = 0 : i64, tpu.core_type = #tpu.core_type<tc>, window_params = [{transform_indices = @transform_0, window_bounds = array<i64: 16, 128>}, {transform_indices = @transform_1, window_bounds = array<i64: 1, 128, 128>}, {transform_indices = @transform_2, window_bounds = array<i64: 2, 1, 8, 128>}]} {
    %c0 = arith.constant 0 : index
    %c0_0 = arith.constant 0 : index
    %0 = vector.load %arg3[%c0, %c0_0] : memref<16x128xbf16, #tpu.memory_space<vmem>>, vector<16x128xbf16>
    %c0_1 = arith.constant 0 : index
    %c0_2 = arith.constant 0 : index
    %c0_3 = arith.constant 0 : index
    %1 = vector.load %arg4[%c0_1, %c0_2, %c0_3] : memref<1x128x128xbf16, #tpu.memory_space<vmem>>, vector<1x128x128xbf16>
    %2 = vector.shape_cast %1 : vector<1x128x128xbf16> to vector<128x128xbf16>
    %cst = arith.constant dense<0.000000e+00> : vector<16x128xf32>
    %3 = tpu.matmul %0, %2, %cst {dimension_numbers = #tpu.dot_dimension_numbers<[1], [0], [0], [1], [0, 0, 1, 1], [], []>} : vector<16x128xbf16>, vector<128x128xbf16>, vector<16x128xf32> -> vector<16x128xf32>
    %4 = vector.shape_cast %3 : vector<16x128xf32> to vector<2x8x128xf32>
    %c0_4 = arith.constant 0 : index
    %c0_5 = arith.constant 0 : index
    %c0_6 = arith.constant 0 : index
    %c0_7 = arith.constant 0 : index
    %5 = vector.load %arg5[%c0_4, %c0_5, %c0_6, %c0_7] : memref<2x1x8x128xf32, #tpu.memory_space<vmem>>, vector<2x1x8x128xf32>
    %6 = vector.shape_cast %5 : vector<2x1x8x128xf32> to vector<2x8x128xf32>
    %7 = vector.shape_cast %4 : vector<2x8x128xf32> to vector<2x1x8x128xf32>
    tpu.vector_store %arg5[%c0_4, %c0_5, %c0_6, %c0_7], %7 {strides = array<i32>} : memref<2x1x8x128xf32, #tpu.memory_space<vmem>>, vector<2x1x8x128xf32>,
    return
  }
  func.func @transform_0(%arg0: i32, %arg1: i32, %arg2: i32) -> (i32, i32) {
    %c0_i32 = arith.constant 0 : i32
    %c0_i32_0 = arith.constant 0 : i32
    return %arg2, %c0_i32 : i32, i32
  }
  func.func @transform_1(%arg0: i32, %arg1: i32, %arg2: i32) -> (i32, i32, i32) {
    %c0_i32 = arith.constant 0 : i32
    %c0_i32_0 = arith.constant 0 : i32
    return %arg0, %c0_i32, %arg1 : i32, i32, i32
  }
  func.func @transform_2(%arg0: i32, %arg1: i32, %arg2: i32) -> (i32, i32, i32, i32) {
    %c0_i32 = arith.constant 0 : i32
    %c0_i32_0 = arith.constant 0 : i32
    return %arg2, %arg0, %c0_i32, %arg1 : i32, i32, i32, i32
  }
}

</mosaic_0001>

<llo_original>
// kernel: wavelet_transform_5channel.1
$region0: #{wavelet_transform_5channel.1}
  #allocation0 [shape = 'u32[]', space=smem, size = 0x4, offset = 0x4, fixed_abs, tag = 'smem constant byte address 0x4 - core index']
  #allocation1 [shape = 'u32[144,128]{1,0:T(1,128)}', space=vmem, size = 0x12000, scoped, tag = 'internal scratch']
  %s0 = inlined_call_operand.vmem [shape: bf16[16,128], index: 0, kind: input, shape index: {}]
  %s1 = inlined_call_operand.hbm [shape: bf16[5,128,128], index: 1, kind: input, shape index: {}]
  %s2 = inlined_call_operand.vmem [shape: f32[2,5,8,128], index: 2, kind: output, shape index: {}]
  %s3 = sld [smem:[#allocation0]]
  $region79: #{wavelet_transform_5channel.1} parent=0
    _
  %s5 = ssub.s32 1, %s3
  %s6 = scalar_select 0, %s5, %s3
  $region1: #{wavelet_transform_5channel.1} parent=0
    #allocation2 [shape = 'u8[65536]{0}', space=vmem, size = 0x10000, scoped, tag = 'input window, operand 1']
    #allocation3 [shape = 's32[2]{0}', space=sflag, size = 0x8, scoped, tag = 'scoped memory for wavelet_transform_5channel.1']
    #allocation4 [shape = 'u8[16384]{0}', space=vmem, size = 0x4000, scoped, tag = 'output window, operand 0']
    %7 = vsyncpa [#allocation3], 0
    %s8 = scalar_lea.sflag [#allocation3], 1
    %9 = vsyncpa %s8, 0
    loop: start=0, step=1, limit=7
    $region2: #{wavelet_transform_5channel.1} parent=1 // loop_pre_header
      _
    $region3: #{wavelet_transform_5channel.1} parent=1 // loop_header
      %s11 = sphi 0, %s15
      %p12 = scmp.ge.s32.totalorder %s11, 7
      %s18 = sphi 0, %s37
      %s19 = sphi 0, %s33
      %s20 = sphi 0, %s29
      %s21 = sphi 0, %s18
      %s22 = sphi 0, %s19
      %s23 = sphi 0, %s20
      %s24 = sphi 0, %s21
      %s25 = sphi 0, %s22
      %s26 = sphi 0, %s23
      %s40 = sphi 0, %s42
      %s43 = sphi 0, %s40
      %s44 = sphi 0, %s43
      %s60 = sphi 0, %s44
      %s68 = sphi 0, %s70
      %s71 = sphi 0, %s68
      %s72 = sphi 0, %s71
      %s88 = sphi 0, %s72
      %s98 = sphi 0, %s100
      %s101 = sphi 0, %s98
      %s102 = sphi 0, %s101
      %s118 = sphi 0, %s102
    $region4: #{wavelet_transform_5channel.1} parent=1 // loop_header_branch
      %14 = sbr.rel (%p12) target = $region8
    $region5: #{wavelet_transform_5channel.1} parent=1 // loop_body
      %s16 = ssub.s32 %s11, 1
      %s17 = ssub.s32 %s11, 2
      %s27 = sadd.s32 1, %s20
      %p28 = scmp.ge.s32.totalorder %s27, 1
      %s29 = scalar_select %p28, 0, %s27
      %s30 = sadd.s32 1, %s19
      %s31 = scalar_select %p28, %s30, %s19
      %p32 = scmp.ge.s32.totalorder %s31, 1
      %s33 = scalar_select %p32, 0, %s31
      %s34 = sadd.s32 1, %s18
      %s35 = scalar_select %p32, %s34, %s18
      %p36 = scmp.ge.s32.totalorder %s35, 5
      %s37 = scalar_select %p36, 0, %s35
      %s38 = ssub.s32 %s20, %s29
      %p39 = scmp.eq.s32.totalorder %s38, 0
      %s41 = sadd.s32 %s40, 1
      %s42 = scalar_select %p39, %s40, %s41
      %p45 = pneg %p39
      %p46 = scmp.eq.s32.totalorder %s11, 4
      %p47 = por %p45, %p46
      %p48 = scmp.ne.s32.totalorder %s40, %s43
      %p49 = scmp.eq.s32.totalorder %s11, 0
      %p50 = por %p48, %p49
      %p51 = scmp.ne.s32.totalorder %s40, %s43
      %p52 = scmp.eq.s32.totalorder %s16, 4
      %p53 = por %p51, %p52
      %p54 = scmp.ne.s32.totalorder %s43, %s44
      %p55 = scmp.eq.s32.totalorder %s16, 0
      %p56 = por %p54, %p55
      %p57 = scmp.ne.s32.totalorder %s43, %s44
      %p58 = scmp.eq.s32.totalorder %s17, 4
      %p59 = por %p57, %p58
      %p61 = scmp.ne.s32.totalorder %s44, %s60
      %p62 = scmp.eq.s32.totalorder %s17, 0
      %p63 = por %p61, %p62
      %s64 = ssub.s32 %s18, %s37
      %s65 = ssub.s32 %s19, %s33
      %s66 = sor.u32 %s64, %s65
      %p67 = scmp.eq.s32.totalorder %s66, 0
      %s69 = sadd.s32 %s68, 1
      %s70 = scalar_select %p67, %s68, %s69
      %p73 = pneg %p67
      %p74 = scmp.eq.s32.totalorder %s11, 4
      %p75 = por %p73, %p74
      %p76 = scmp.ne.s32.totalorder %s68, %s71
      %p77 = scmp.eq.s32.totalorder %s11, 0
      %p78 = por %p76, %p77
      %p79 = scmp.ne.s32.totalorder %s68, %s71
      %p80 = scmp.eq.s32.totalorder %s16, 4
      %p81 = por %p79, %p80
      %p82 = scmp.ne.s32.totalorder %s71, %s72
      %p83 = scmp.eq.s32.totalorder %s16, 0
      %p84 = por %p82, %p83
      %p85 = scmp.ne.s32.totalorder %s71, %s72
      %p86 = scmp.eq.s32.totalorder %s17, 4
      %p87 = por %p85, %p86
      %p89 = scmp.ne.s32.totalorder %s72, %s88
      %p90 = scmp.eq.s32.totalorder %s17, 0
      %p91 = por %p89, %p90
      %s92 = ssub.s32 %s20, %s29
      %s93 = ssub.s32 %s18, %s37
      %s94 = sor.u32 %s92, %s93
      %s95 = ssub.s32 %s19, %s33
      %s96 = sor.u32 %s94, %s95
      %p97 = scmp.eq.s32.totalorder %s96, 0
      %s99 = sadd.s32 %s98, 1
      %s100 = scalar_select %p97, %s98, %s99
      %p103 = pneg %p97
      %p104 = scmp.eq.s32.totalorder %s11, 4
      %p105 = por %p103, %p104
      %p106 = scmp.ne.s32.totalorder %s98, %s101
      %p107 = scmp.eq.s32.totalorder %s11, 0
      %p108 = por %p106, %p107
      %p109 = scmp.ne.s32.totalorder %s98, %s101
      %p110 = scmp.eq.s32.totalorder %s16, 4
      %p111 = por %p109, %p110
      %p112 = scmp.ne.s32.totalorder %s101, %s102
      %p113 = scmp.eq.s32.totalorder %s16, 0
      %p114 = por %p112, %p113
      %p115 = scmp.ne.s32.totalorder %s101, %s102
      %p116 = scmp.eq.s32.totalorder %s17, 4
      %p117 = por %p115, %p116
      %p119 = scmp.ne.s32.totalorder %s102, %s118
      %p120 = scmp.eq.s32.totalorder %s17, 0
      %p121 = por %p119, %p120
      %p122 = scmp.le.s32.totalorder 1, %s11
      %p123 = scmp.lt.s32.totalorder %s11, 6
      %p124 = pnand %p122, %p123
      %p125 = pneg %p124
      // Predicated region
      $region9: #{wavelet_transform_5channel.1} parent=5 // pred_check
        _
      $region10: #{wavelet_transform_5channel.1} parent=5 // pred_check_branch
        %127 = sbr.rel (%p124) target = $region12
      $region11: #{wavelet_transform_5channel.1} parent=5 // pred_region
        %s128 = ssub.s32 %s11, 1
        // Predicated region
        $region13: #{wavelet_transform_5channel.1} parent=11 // pred_check
          %p129 = pneg %p56
        $region14: #{wavelet_transform_5channel.1} parent=11 // pred_check_branch
          %131 = sbr.rel (%p129) target = $region16
        $region15: #{wavelet_transform_5channel.1} parent=11 // pred_region
          %s132 = smul.u32 2, %s23
          %p133 = scmp.lt.s32.totalorder %s132, 1
          %s134 = scalar_select %p133, %s132, 1
          %s135 = smul.addr %s134, 4
          %s136 = scalar_lea.vmem %s0, %s135
          %s137 = smul.u32 2, %s23
        $region16: #{wavelet_transform_5channel.1} parent=11 // pred_fallthru
          _
      $region12: #{wavelet_transform_5channel.1} parent=5 // pred_fallthru
        _
      %p138 = scmp.lt.s32.totalorder %s11, 5
      // Predicated region
      $region17: #{wavelet_transform_5channel.1} parent=5 // pred_check
        %p139 = pneg %p138
      $region18: #{wavelet_transform_5channel.1} parent=5 // pred_check_branch
        %141 = sbr.rel (%p139) target = $region20
      $region19: #{wavelet_transform_5channel.1} parent=5 // pred_region
        // Predicated region
        $region21: #{wavelet_transform_5channel.1} parent=19 // pred_check
          %p142 = pneg %p78
        $region22: #{wavelet_transform_5channel.1} parent=19 // pred_check_branch
          %144 = sbr.rel (%p142) target = $region24
        $region23: #{wavelet_transform_5channel.1} parent=19 // pred_region
          %s145 = sand.u32 %s68, 1
          %s146 = scalar_lea.sflag [#allocation3], %s145
          %s147 = sand.u32 %s68, 1
          %s148 = smul.addr %s147, 64
          %s149 = scalar_lea.vmem [#allocation2], %s148
          %s151 = ssub.s32 1024, 1024
          %152 = vsyncadd %s146, %s151
          %s153 = smul.addr %s18, 16
          %s154 = sadd.s32 %s19, %s153
          %s155 = smul.addr %s154, 64
          %s156 = scalar_lea.hbm %s1, %s155
          %s157 = sshll.u32 %s149, 4
          %s158 = int_to_ptr.vmem [resolvable:$true] %s157
          %163 = dma.hbm_to_vmem [thread:$0]  %s156, 1024, %s158, %s146, 64, 64, 4
        $region24: #{wavelet_transform_5channel.1} parent=19 // pred_fallthru
          _
      $region20: #{wavelet_transform_5channel.1} parent=5 // pred_fallthru
        _
      %p164 = scmp.le.s32.totalorder 1, %s11
      %p165 = scmp.lt.s32.totalorder %s11, 6
      %p166 = pnand %p164, %p165
      %p167 = pneg %p166
      // Predicated region
      $region25: #{wavelet_transform_5channel.1} parent=5 // pred_check
        _
      $region26: #{wavelet_transform_5channel.1} parent=5 // pred_check_branch
        %169 = sbr.rel (%p166) target = $region28
      $region27: #{wavelet_transform_5channel.1} parent=5 // pred_region
        %s170 = ssub.s32 %s11, 1
        %s171 = sand.u32 %s71, 1
        %s172 = scalar_lea.sflag [#allocation3], %s171
        %s173 = sand.u32 %s71, 1
        %s174 = smul.addr %s173, 64
        %s175 = scalar_lea.vmem [#allocation2], %s174
        // Predicated region
        $region29: #{wavelet_transform_5channel.1} parent=27 // pred_check
          %p176 = pneg %p84
        $region30: #{wavelet_transform_5channel.1} parent=27 // pred_check_branch
          %178 = sbr.rel (%p176) target = $region32
        $region31: #{wavelet_transform_5channel.1} parent=27 // pred_region
          %179 = dma.done %s172, 1024
        $region32: #{wavelet_transform_5channel.1} parent=27 // pred_fallthru
          _
        %s180 = smul.u32 2, %s23
        %p181 = scmp.lt.s32.totalorder %s180, 1
        %s182 = scalar_select %p181, %s180, 1
        %s183 = smul.addr %s182, 4
        %s184 = scalar_lea.vmem %s0, %s183
        %p185 = pneg %p56
        %p186 = pneg %p53
        %s187 = sand.u32 %s71, 1
        %s188 = scalar_lea.sflag [#allocation3], %s187
        %s189 = sand.u32 %s71, 1
        %s190 = smul.addr %s189, 64
        %s191 = scalar_lea.vmem [#allocation2], %s190
        %p192 = pneg %p84
        %p193 = pneg %p81
        %p194 = pneg %p114
        %p195 = pneg %p111
        %s196 = sand.u32 %s101, 1
        %s197 = sand.u32 %s101, 1
        %s198 = smul.addr %s197, 16
        %s199 = scalar_lea.vmem [#allocation4], %s198
        %s200 = smul.u32 2, %s23
        %p201 = scmp.lt.s32.totalorder %s200, 1
        %s202 = scalar_select %p201, %s200, 1
        %s203 = smul.addr %s202, 4
        %s204 = scalar_lea.vmem %s0, %s203
        %s205 = smul.u32 2, %s23
        %s206 = smul.u32 2, %s23
        %v208 = vld [vmem:[%s204] sm:$0xf]
        %v209 = vld [vmem:[%s204 + $0x4] sm:$0xf]
        %v210 = vld [vmem:[%s175] sm:$0xf]
        %v211 = vld [vmem:[%s175 + $0x4] sm:$0xf]
        %v212 = vld [vmem:[%s175 + $0x8] sm:$0xf]
        %v213 = vld [vmem:[%s175 + $0xc] sm:$0xf]
        %v214 = vld [vmem:[%s175 + $0x10] sm:$0xf]
        %v215 = vld [vmem:[%s175 + $0x14] sm:$0xf]
        %v216 = vld [vmem:[%s175 + $0x18] sm:$0xf]
        %v217 = vld [vmem:[%s175 + $0x1c] sm:$0xf]
        %v218 = vld [vmem:[%s175 + $0x20] sm:$0xf]
        %v219 = vld [vmem:[%s175 + $0x24] sm:$0xf]
        %v220 = vld [vmem:[%s175 + $0x28] sm:$0xf]
        %v221 = vld [vmem:[%s175 + $0x2c] sm:$0xf]
        %v222 = vld [vmem:[%s175 + $0x30] sm:$0xf]
        %v223 = vld [vmem:[%s175 + $0x34] sm:$0xf]
        %v224 = vld [vmem:[%s175 + $0x38] sm:$0xf]
        %v225 = vld [vmem:[%s175 + $0x3c] sm:$0xf]
        %v228 = vunpack.c.l.b16 %v208
        %v229 = vunpack.c.l.b16 %v209
        %v230 = vpack.c.b16 %v229, %v228
        %v248 = vunpack.c.l.b16 %v210
        %v249 = vunpack.c.l.b16 %v211
        %v250 = vunpack.c.l.b16 %v212
        %v251 = vunpack.c.l.b16 %v213
        %v252 = vunpack.c.l.b16 %v214
        %v253 = vunpack.c.l.b16 %v215
        %v254 = vunpack.c.l.b16 %v216
        %v255 = vunpack.c.l.b16 %v217
        %v256 = vunpack.c.l.b16 %v218
        %v257 = vunpack.c.l.b16 %v219
        %v258 = vunpack.c.l.b16 %v220
        %v259 = vunpack.c.l.b16 %v221
        %v260 = vunpack.c.l.b16 %v222
        %v261 = vunpack.c.l.b16 %v223
        %v262 = vunpack.c.l.b16 %v224
        %v263 = vunpack.c.l.b16 %v225
        %v264 = vpack.c.b16 %v249, %v248
        %v265 = vpack.c.b16 %v251, %v250
        %v266 = vpack.c.b16 %v253, %v252
        %v267 = vpack.c.b16 %v255, %v254
        %v268 = vpack.c.b16 %v257, %v256
        %v269 = vpack.c.b16 %v259, %v258
        %v270 = vpack.c.b16 %v261, %v260
        %v271 = vpack.c.b16 %v263, %v262
        %280 = vmatprep.subr.bf16.mxu0 0
        %281 = vmatpush1.bf16.msra.mxu0 %v264
        %282 = vmatprep.subr.bf16.mxu0 0
        %283 = vmatpush1.bf16.msra.mxu0 %v265
        %284 = vmatprep.subr.bf16.mxu0 0
        %285 = vmatpush1.bf16.msra.mxu0 %v266
        %286 = vmatprep.subr.bf16.mxu0 0
        %287 = vmatpush1.bf16.msra.mxu0 %v267
        %288 = vmatprep.subr.bf16.mxu0 0
        %289 = vmatpush1.bf16.msra.mxu0 %v268
        %290 = vmatprep.subr.bf16.mxu0 0
        %291 = vmatpush1.bf16.msra.mxu0 %v269
        %292 = vmatprep.subr.bf16.mxu0 0
        %293 = vmatpush1.bf16.msra.mxu0 %v270
        %294 = vmatprep.subr.bf16.mxu0 0
        %295 = vmatpush1.bf16.msra.mxu0 %v271
        %296 = vmatprep.subr.bf16.mxu0 0
        %297 = vmatpush1.bf16.msra.mxu0 0
        %298 = vmatprep.subr.bf16.mxu0 0
        %299 = vmatpush1.bf16.msra.mxu0 0
        %300 = vmatprep.subr.bf16.mxu0 0
        %301 = vmatpush1.bf16.msra.mxu0 0
        %302 = vmatprep.subr.bf16.mxu0 0
        %303 = vmatpush1.bf16.msra.mxu0 0
        %304 = vmatprep.subr.bf16.mxu0 0
        %305 = vmatpush1.bf16.msra.mxu0 0
        %306 = vmatprep.subr.bf16.mxu0 0
        %307 = vmatpush1.bf16.msra.mxu0 0
        %308 = vmatprep.subr.bf16.mxu0 0
        %309 = vmatpush1.bf16.msra.mxu0 0
        %310 = vmatprep.subr.bf16.mxu0 0
        %311 = vmatpush1.bf16.msra.mxu0 0
        %312 = vmatprep.mubr.bf16.mxu0 0
        %313 = vmatmul.mubr.bf16.gmra.mrb[0].mxu0 %v230
        %v314 = vpop.f32.mrb[0].mxu0
        %v315 = vadd.f32 0.0, %v314
        %v316 = vpop.f32.mrb[0].mxu0
        %v317 = vpop.f32.mrb[0].mxu0
        %v318 = vadd.f32 0.0, %v317
        %v319 = vpop.f32.mrb[0].mxu0
        %320 = vdwg.mxu0
        %321 = vst [vmem:[%s199] sm:$0xff] %v315
        %322 = vst [vmem:[%s199 + $0x8] sm:$0xff] %v318
        %s323 = sand.u32 %s101, 1
        %s324 = sand.u32 %s101, 1
        %s325 = smul.addr %s324, 16
        %s326 = scalar_lea.vmem [#allocation4], %s325
        // Predicated region
        $region33: #{wavelet_transform_5channel.1} parent=27 // pred_check
          %p327 = pneg %p111
        $region34: #{wavelet_transform_5channel.1} parent=27 // pred_check_branch
          %329 = sbr.rel (%p327) target = $region36
        $region35: #{wavelet_transform_5channel.1} parent=27 // pred_region
          %s330 = smul.u32 2, %s23
          %s331 = sadd.s32 %s22, %s21
          %s332 = smul.addr %s330, 5
          %s333 = sadd.s32 %s331, %s332
          %s334 = smul.addr %s333, 8
          %s335 = scalar_lea.vmem %s2, %s334
          // Predicated region
          $region37: #{wavelet_transform_5channel.1} parent=35 // pred_check
            _
          $region38: #{wavelet_transform_5channel.1} parent=35 // pred_check_branch
            %337 = sbr.rel (0) target = $region40
          $region39: #{wavelet_transform_5channel.1} parent=35 // pred_region
            // Predicated region
            $region41: #{wavelet_transform_5channel.1} parent=39 // pred_check
              _
            $region42: #{wavelet_transform_5channel.1} parent=39 // pred_check_branch
              %339 = sbr.rel (0) target = $region44
            $region43: #{wavelet_transform_5channel.1} parent=39 // pred_region
              // Predicated region
              $region56: #{wavelet_transform_5channel.1} parent=43 // pred_check
                _
              $region57: #{wavelet_transform_5channel.1} parent=43 // pred_check_branch
                %356 = sbr.rel (0) target = $region59
              $region58: #{wavelet_transform_5channel.1} parent=43 // pred_region
                loop: start=0, step=1, limit=1
                $region60: #{wavelet_transform_5channel.1} parent=58 // loop_pre_header
                  _
                $region61: #{wavelet_transform_5channel.1} parent=58 // loop_header
                  %s358 = sphi 0, %s362
                  %p359 = scmp.ge.s32.totalorder %s358, 1
                  %s363 = sphi %s326, %s326
                  %s364 = sphi %s335, %s335
                $region62: #{wavelet_transform_5channel.1} parent=58 // loop_header_branch
                  %361 = sbr.rel (%p359) target = $region66
                $region63: #{wavelet_transform_5channel.1} parent=58 // loop_body
                  %v365 = vld [vmem:[%s363] sm:$0xff]
                  %366 = vst [vmem:[%s364] sm:$0xff] %v365
                  %v367 = vld [vmem:[%s363 + $0x8] sm:$0xff]
                  %368 = vst [vmem:[%s364 + $0x28] sm:$0xff] %v367
                $region64: #{wavelet_transform_5channel.1} parent=58 // loop_footer
                  %s362 = sadd.s32 1, %s358
                $region65: #{wavelet_transform_5channel.1} parent=58 // loop_footer_branch
                  %357 = sbr.rel target = $region61
                $region66: #{wavelet_transform_5channel.1} parent=58 // loop_exit
                  _
              $region59: #{wavelet_transform_5channel.1} parent=43 // pred_fallthru
                _
              // Predicated region
              $region67: #{wavelet_transform_5channel.1} parent=43 // pred_check
                _
              $region68: #{wavelet_transform_5channel.1} parent=43 // pred_check_branch
                %370 = sbr.rel target = $region70
              $region69: #{wavelet_transform_5channel.1} parent=43 // pred_region
                _
              $region70: #{wavelet_transform_5channel.1} parent=43 // pred_fallthru
                _
            $region44: #{wavelet_transform_5channel.1} parent=39 // pred_fallthru
              _
            // Predicated region
            $region45: #{wavelet_transform_5channel.1} parent=39 // pred_check
              _
            $region46: #{wavelet_transform_5channel.1} parent=39 // pred_check_branch
              %341 = sbr.rel target = $region48
            $region47: #{wavelet_transform_5channel.1} parent=39 // pred_region
              loop: start=0, step=1, limit=1
              $region49: #{wavelet_transform_5channel.1} parent=47 // loop_pre_header
                _
              $region50: #{wavelet_transform_5channel.1} parent=47 // loop_header
                %s344 = sphi 0, %s348
                %p345 = scmp.ge.s32.totalorder %s344, 1
                %s349 = sphi %s326, %s326
                %s350 = sphi %s335, %s335
              $region51: #{wavelet_transform_5channel.1} parent=47 // loop_header_branch
                %347 = sbr.rel (%p345) target = $region55
              $region52: #{wavelet_transform_5channel.1} parent=47 // loop_body
                %v351 = vld [vmem:[%s349] sm:$0xff]
                %352 = vst [vmem:[%s350] sm:$0xff] %v351
                %v353 = vld [vmem:[%s349 + $0x8] sm:$0xff]
                %354 = vst [vmem:[%s350 + $0x28] sm:$0xff] %v353
              $region53: #{wavelet_transform_5channel.1} parent=47 // loop_footer
                %s348 = sadd.s32 1, %s344
              $region54: #{wavelet_transform_5channel.1} parent=47 // loop_footer_branch
                %343 = sbr.rel target = $region50
              $region55: #{wavelet_transform_5channel.1} parent=47 // loop_exit
                _
            $region48: #{wavelet_transform_5channel.1} parent=39 // pred_fallthru
              _
          $region40: #{wavelet_transform_5channel.1} parent=35 // pred_fallthru
            _
          %371 = vnop
        $region36: #{wavelet_transform_5channel.1} parent=27 // pred_fallthru
          _
      $region28: #{wavelet_transform_5channel.1} parent=5 // pred_fallthru
        _
      %p372 = scmp.le.s32.totalorder 2, %s11
      // Predicated region
      $region71: #{wavelet_transform_5channel.1} parent=5 // pred_check
        %p373 = pneg %p372
      $region72: #{wavelet_transform_5channel.1} parent=5 // pred_check_branch
        %375 = sbr.rel (%p373) target = $region74
      $region73: #{wavelet_transform_5channel.1} parent=5 // pred_region
        %s376 = ssub.s32 %s11, 2
        // Predicated region
        $region75: #{wavelet_transform_5channel.1} parent=73 // pred_check
          %p377 = pneg %p117
        $region76: #{wavelet_transform_5channel.1} parent=73 // pred_check_branch
          %379 = sbr.rel (%p377) target = $region78
        $region77: #{wavelet_transform_5channel.1} parent=73 // pred_region
          %s380 = sand.u32 %s102, 1
          %s381 = sand.u32 %s102, 1
          %s382 = smul.addr %s381, 16
          %s383 = scalar_lea.vmem [#allocation4], %s382
        $region78: #{wavelet_transform_5channel.1} parent=73 // pred_fallthru
          _
      $region74: #{wavelet_transform_5channel.1} parent=5 // pred_fallthru
        _
    $region6: #{wavelet_transform_5channel.1} parent=1 // loop_footer
      %s15 = sadd.s32 1, %s11
    $region7: #{wavelet_transform_5channel.1} parent=1 // loop_footer_branch
      %10 = sbr.rel target = $region3
    $region8: #{wavelet_transform_5channel.1} parent=1 // loop_exit
      _
    %384 = vsyncpa [#allocation3], 1
    %s385 = scalar_lea.sflag [#allocation3], 1
    %386 = vsyncpa %s385, 1

</llo_original>
